<compile_context>
chip_gen: v6e
topology: v6e:2x2x1
jax: 0.10.0
libtpu: 0.0.40
codegen_flags: <defaults>
</compile_context>

<pallas_src>
import functools

import jax
import jax.numpy as jnp
from jax.experimental import pallas as pl
from jax.experimental.pallas import tpu as pltpu

H1, H2, OUT = 64, 32, 2
W_ROWS = 112          # 64 (W1) + 32 (W2) + 16 (W3 rows 96..97 + pad); mult of 16
TILE_B_MAX = 4096     # batch tile (lane axis); multiple of 128


def _round_up(n, m):
    return (n + m - 1) // m * m


def _mlp_kernel(x_ref, w_ref, b_ref, o_ref, *, num_features):
    # x_ref: [F, TILE_B] bf16   (batch on lanes -> lane-dense activations)
    # w_ref: [W_ROWS, 128] bf16 packed weights (torch [out, in] layout)
    # b_ref: [W_ROWS, 1]   f32  packed biases (column vectors)
    x = x_ref[...]
    w1 = w_ref[0:H1, 0:num_features]            # [64, F]
    w2 = w_ref[H1:H1 + H2, 0:H1]                # [32, 64]
    w3 = w_ref[H1 + H2:H1 + H2 + OUT, 0:H2]     # [2, 32]
    b1 = b_ref[0:H1, :]                         # [64, 1]
    b2 = b_ref[H1:H1 + H2, :]                   # [32, 1]
    b3 = b_ref[H1 + H2:H1 + H2 + OUT, :]        # [2, 1]

    # Layer 1: Linear(F, 64) + ReLU  (bf16 MXU matmul, f32 accumulate/bias/ReLU)
    h1 = jnp.dot(w1, x, preferred_element_type=jnp.float32) + b1
    h1 = jnp.maximum(h1, 0.0).astype(jnp.bfloat16)
    # Layer 2: Linear(64, 32) + ReLU
    h2 = jnp.dot(w2, h1, preferred_element_type=jnp.float32) + b2
    h2 = jnp.maximum(h2, 0.0).astype(jnp.bfloat16)
    # Layer 3: Linear(32, 2)
    out = jnp.dot(w3, h2, preferred_element_type=jnp.float32) + b3
    o_ref[...] = out.astype(o_ref.dtype)        # [2, TILE_B] lane-dense store


def pack_params(params, num_features):
    """Pack the 6 tiny parameter arrays into one bf16 weight slab + one f32
    bias column (2 resident DMAs instead of 6)."""
    w = jnp.zeros((W_ROWS, 128), jnp.float32)
    w = w.at[0:H1, 0:num_features].set(params["w1"])
    w = w.at[H1:H1 + H2, 0:H1].set(params["w2"])
    w = w.at[H1 + H2:H1 + H2 + OUT, 0:H2].set(params["w3"])
    b = jnp.zeros((W_ROWS, 1), jnp.float32)
    b = b.at[0:H1, 0].set(params["b1"])
    b = b.at[H1:H1 + H2, 0].set(params["b2"])
    b = b.at[H1 + H2:H1 + H2 + OUT, 0].set(params["b3"])
    return w.astype(jnp.bfloat16), b


def mynn_forward(x, params):
    """x: [B, num_features] float32. params: torch-layout w1,b1,w2,b2,w3,b3."""
    B, F = x.shape
    w_buf, b_buf = pack_params(params, F)

    tile_b = min(TILE_B_MAX, _round_up(B, 128))
    Bp = _round_up(B, tile_b)
    # batch-on-lanes: [F, Bp]; zero-pad the batch tail; bf16 for the MXU path.
    xT = jnp.pad(x.T, ((0, 0), (0, Bp - B))).astype(jnp.bfloat16)

    out_t = pl.pallas_call(
        functools.partial(_mlp_kernel, num_features=F),
        out_shape=jax.ShapeDtypeStruct((OUT, Bp), jnp.float32),
        grid=(Bp // tile_b,),
        in_specs=[
            pl.BlockSpec((F, tile_b), lambda i: (0, i)),      # x: streamed/double-buffered
            pl.BlockSpec((W_ROWS, 128), lambda i: (0, 0)),    # weights: VMEM-resident
            pl.BlockSpec((W_ROWS, 1), lambda i: (0, 0)),      # biases: VMEM-resident
        ],
        out_specs=pl.BlockSpec((OUT, tile_b), lambda i: (0, i)),
        compiler_params=pltpu.CompilerParams(
            dimension_semantics=("parallel",),   # v7x: shard batch grid over 2 TCs
        ),
    )(xT, w_buf, b_buf)
    return out_t[:, :B].T                        # [B, 2]


def init_params(num_features, key):
    """Deterministic synthetic parameters, torch nn.Linear layout ([out, in])."""
    ks = jax.random.split(key, 6)

    def lin(kw, kb, fan_in, fan_out):
        bound = 1.0 / (fan_in ** 0.5)
        w = jax.random.uniform(kw, (fan_out, fan_in), jnp.float32, -bound, bound)
        b = jax.random.uniform(kb, (fan_out,), jnp.float32, -bound, bound)
        return w, b

    w1, b1 = lin(ks[0], ks[1], num_features, H1)
    w2, b2 = lin(ks[2], ks[3], H1, H2)
    w3, b3 = lin(ks[4], ks[5], H2, OUT)
    return {"w1": w1, "b1": b1, "w2": w2, "b2": b2, "w3": w3, "b3": b3}


def ref_forward(x, p):
    """Plain-JAX reference using the same bf16-operand / f32-accumulate recipe."""
    bf, f32 = jnp.bfloat16, jnp.float32
    h1 = jnp.maximum(
        jnp.dot(x.astype(bf), p["w1"].astype(bf).T, preferred_element_type=f32)
        + p["b1"], 0.0)
    h2 = jnp.maximum(
        jnp.dot(h1.astype(bf), p["w2"].astype(bf).T, preferred_element_type=f32)
        + p["b2"], 0.0)
    return (jnp.dot(h2.astype(bf), p["w3"].astype(bf).T, preferred_element_type=f32)
            + p["b3"])


if __name__ == "__main__":
    num_features = 4   # CartPole observation size
    batch = 8

    key = jax.random.PRNGKey(0)
    kx, kp = jax.random.split(key)
    x = jax.random.normal(kx, (batch, num_features), dtype=jnp.float32)
    params = init_params(num_features, kp)

    out = mynn_forward(x, params)
    jax.block_until_ready(out)

    expected = ref_forward(x, params)
    assert out.shape == (batch, OUT)
    assert jnp.allclose(out, expected, atol=2e-3, rtol=2e-3), (
        float(jnp.max(jnp.abs(out - expected))))

    print("KERNEL_OK")
</pallas_src>

<mosaic_0001>
module attributes {stable_mosaic.version = 11 : i64} {
  func.func @_mlp_kernel(%arg0: i32, %arg1: memref<4x128xbf16, #tpu.memory_space<vmem>>, %arg2: memref<112x128xbf16, #tpu.memory_space<vmem>>, %arg3: memref<112x1xf32, #tpu.memory_space<vmem>>, %arg4: memref<2x128xf32, #tpu.memory_space<vmem>>) attributes {dimension_semantics = [#tpu.dimension_semantics<parallel>], iteration_bounds = array<i64: 1>, scalar_prefetch = 0 : i64, scratch_operands = 0 : i64, tpu.core_type = #tpu.core_type<tc>, window_params = [{transform_indices = @transform_0, window_bounds = array<i64: 4, 128>}, {pipeline_mode = #tpu.pipeline_mode<synchronous>, transform_indices = @transform_1, window_bounds = array<i64: 112, 128>}, {pipeline_mode = #tpu.pipeline_mode<synchronous>, transform_indices = @transform_2, window_bounds = array<i64: 112, 1>}, {transform_indices = @transform_3, window_bounds = array<i64: 2, 128>}]} {
    %c0 = arith.constant 0 : index
    %c0_0 = arith.constant 0 : index
    %0 = vector.load %arg1[%c0, %c0_0] : memref<4x128xbf16, #tpu.memory_space<vmem>>, vector<4x128xbf16>
    %c0_1 = arith.constant 0 : index
    %c0_2 = arith.constant 0 : index
    %1 = vector.load %arg2[%c0_1, %c0_2] : memref<112x128xbf16, #tpu.memory_space<vmem>>, vector<64x4xbf16>
    %c64 = arith.constant 64 : index
    %c0_3 = arith.constant 0 : index
    %2 = vector.load %arg2[%c64, %c0_3] : memref<112x128xbf16, #tpu.memory_space<vmem>>, vector<32x64xbf16>
    %c96 = arith.constant 96 : index
    %c0_4 = arith.constant 0 : index
    %3 = vector.load %arg2[%c96, %c0_4] : memref<112x128xbf16, #tpu.memory_space<vmem>>, vector<2x32xbf16>
    %c0_5 = arith.constant 0 : index
    %c0_6 = arith.constant 0 : index
    %4 = vector.load %arg3[%c0_5, %c0_6] : memref<112x1xf32, #tpu.memory_space<vmem>>, vector<64x1xf32>
    %c64_7 = arith.constant 64 : index
    %c0_8 = arith.constant 0 : index
    %5 = vector.load %arg3[%c64_7, %c0_8] : memref<112x1xf32, #tpu.memory_space<vmem>>, vector<32x1xf32>
    %c96_9 = arith.constant 96 : index
    %c0_10 = arith.constant 0 : index
    %6 = vector.load %arg3[%c96_9, %c0_10] : memref<112x1xf32, #tpu.memory_space<vmem>>, vector<2x1xf32>
    %cst = arith.constant dense<0.000000e+00> : vector<64x128xf32>
    %7 = tpu.matmul %1, %0, %cst {dimension_numbers = #tpu.dot_dimension_numbers<[1], [0], [0], [1], [0, 0, 1, 1], [], []>} : vector<64x4xbf16>, vector<4x128xbf16>, vector<64x128xf32> -> vector<64x128xf32>
    %8 = vector.broadcast %4 : vector<64x1xf32> to vector<64x128xf32>
    %9 = arith.addf %7, %8 : vector<64x128xf32>
    %cst_11 = arith.constant 0.000000e+00 : f32
    %10 = vector.broadcast %cst_11 : f32 to vector<64x128xf32>
    %11 = arith.maximumf %9, %10 : vector<64x128xf32>
    %12 = arith.truncf %11 : vector<64x128xf32> to vector<64x128xbf16>
    %cst_12 = arith.constant dense<0.000000e+00> : vector<32x128xf32>
    %13 = tpu.matmul %2, %12, %cst_12 {dimension_numbers = #tpu.dot_dimension_numbers<[1], [0], [0], [1], [0, 0, 1, 1], [], []>} : vector<32x64xbf16>, vector<64x128xbf16>, vector<32x128xf32> -> vector<32x128xf32>
    %14 = vector.broadcast %5 : vector<32x1xf32> to vector<32x128xf32>
    %15 = arith.addf %13, %14 : vector<32x128xf32>
    %cst_13 = arith.constant 0.000000e+00 : f32
    %16 = vector.broadcast %cst_13 : f32 to vector<32x128xf32>
    %17 = arith.maximumf %15, %16 : vector<32x128xf32>
    %18 = arith.truncf %17 : vector<32x128xf32> to vector<32x128xbf16>
    %cst_14 = arith.constant dense<0.000000e+00> : vector<2x128xf32>
    %19 = tpu.matmul %3, %18, %cst_14 {dimension_numbers = #tpu.dot_dimension_numbers<[1], [0], [0], [1], [0, 0, 1, 1], [], []>} : vector<2x32xbf16>, vector<32x128xbf16>, vector<2x128xf32> -> vector<2x128xf32>
    %20 = vector.broadcast %6 : vector<2x1xf32> to vector<2x128xf32>
    %21 = arith.addf %19, %20 : vector<2x128xf32>
    %c0_15 = arith.constant 0 : index
    %c0_16 = arith.constant 0 : index
    %22 = vector.load %arg4[%c0_15, %c0_16] : memref<2x128xf32, #tpu.memory_space<vmem>>, vector<2x128xf32>
    tpu.vector_store %arg4[%c0_15, %c0_16], %21 {strides = array<i32>} : memref<2x128xf32, #tpu.memory_space<vmem>>, vector<2x128xf32>,
    return
  }
  func.func @transform_0(%arg0: i32) -> (i32, i32) {
    %c0_i32 = arith.constant 0 : i32
    %c0_i32_0 = arith.constant 0 : i32
    return %c0_i32, %arg0 : i32, i32
  }
  func.func @transform_1(%arg0: i32) -> (i32, i32) {
    %c0_i32 = arith.constant 0 : i32
    %c0_i32_0 = arith.constant 0 : i32
    %c0_i32_1 = arith.constant 0 : i32
    return %c0_i32, %c0_i32_0 : i32, i32
  }
  func.func @transform_2(%arg0: i32) -> (i32, i32) {
    %c0_i32 = arith.constant 0 : i32
    %c0_i32_0 = arith.constant 0 : i32
    %c0_i32_1 = arith.constant 0 : i32
    return %c0_i32, %c0_i32_0 : i32, i32
  }
  func.func @transform_3(%arg0: i32) -> (i32, i32) {
    %c0_i32 = arith.constant 0 : i32
    %c0_i32_0 = arith.constant 0 : i32
    return %c0_i32, %arg0 : i32, i32
  }
}

</mosaic_0001>

<llo_original>
// kernel: tpu_custom_call.1
$region0: #{tpu_custom_call.1}
  #allocation0 [shape = 'u32[]', space=smem, size = 0x4, offset = 0x4, fixed_abs, tag = 'smem constant byte address 0x4 - core index']
  #allocation1 [shape = 'u32[144,128]{1,0:T(1,128)}', space=vmem, size = 0x12000, scoped, tag = 'internal scratch']
  %s0 = inlined_call_operand.vmem [shape: bf16[4,128], index: 0, kind: input, shape index: {}]
  %s1 = inlined_call_operand.vmem [shape: bf16[112,128], index: 1, kind: input, shape index: {}]
  %s2 = inlined_call_operand.vmem [shape: f32[112,1], index: 2, kind: input, shape index: {}]
  %s3 = inlined_call_operand.hbm [shape: f32[2,128], index: 3, kind: output, shape index: {}]
  %s4 = sld [smem:[#allocation0]]
  $region22: #{tpu_custom_call.1} parent=0
    _
  %s6 = ssub.s32 1, %s4
  %s7 = scalar_select 0, %s6, %s4
  $region1: #{tpu_custom_call.1} parent=0
    #allocation2 [shape = 'u8[1024]{0}', space=vmem, size = 0x400, scoped, tag = 'output window, operand 0, single buffered']
    #allocation3 [shape = 's32[1]{0}', space=sflag, size = 0x4, scoped, tag = 'scoped memory for tpu_custom_call.1']
    %8 = vsyncpa [#allocation3], 0
    // Predicated region
    $region2: #{tpu_custom_call.1} parent=1 // pred_check
      _
    $region3: #{tpu_custom_call.1} parent=1 // pred_check_branch
      %10 = sbr.rel (0) target = $region5
    $region4: #{tpu_custom_call.1} parent=1 // pred_region
      _
    $region5: #{tpu_custom_call.1} parent=1 // pred_fallthru
      _
    // Predicated region
    $region6: #{tpu_custom_call.1} parent=1 // pred_check
      _
    $region7: #{tpu_custom_call.1} parent=1 // pred_check_branch
      %12 = sbr.rel (0) target = $region9
    $region8: #{tpu_custom_call.1} parent=1 // pred_region
      _
    $region9: #{tpu_custom_call.1} parent=1 // pred_fallthru
      _
    // Predicated region
    $region10: #{tpu_custom_call.1} parent=1 // pred_check
      _
    $region11: #{tpu_custom_call.1} parent=1 // pred_check_branch
      %14 = sbr.rel (0) target = $region13
    $region12: #{tpu_custom_call.1} parent=1 // pred_region
      _
    $region13: #{tpu_custom_call.1} parent=1 // pred_fallthru
      _
    %v16 = vld [vmem:[%s0] sm:$0x3]
    %v17 = vld [vmem:[%s1] sm:$0xf]
    %v18 = vld [vmem:[%s1 + $0x4] sm:$0xf]
    %v19 = vld [vmem:[%s1 + $0x8] sm:$0xf]
    %v20 = vld [vmem:[%s1 + $0xc] sm:$0xf]
    %v21 = vld [vmem:[%s1 + $0x10] sm:$0xf]
    %v22 = vld [vmem:[%s1 + $0x14] sm:$0xf]
    %v23 = vld [vmem:[%s1 + $0x18] sm:$0xf]
    %v24 = vld [vmem:[%s1 + $0x1c] sm:$0xf]
    %v25 = vld [vmem:[%s1 + $0x20] sm:$0xf]
    %v26 = vld [vmem:[%s1 + $0x24] sm:$0xf]
    %v27 = vld [vmem:[%s1 + $0x28] sm:$0xf]
    %v28 = vld [vmem:[%s1 + $0x2c] sm:$0xf]
    %v29 = vld [vmem:[%s1 + $0x30] sm:$0x1]
    %v30 = vld [vmem:[%s2] sm:$0xff]
    %v31 = vld [vmem:[%s2 + $0x8] sm:$0xff]
    %v32 = vld [vmem:[%s2 + $0x10] sm:$0xff]
    %v33 = vld [vmem:[%s2 + $0x18] sm:$0xff]
    %v34 = vld [vmem:[%s2 + $0x20] sm:$0xff]
    %v35 = vld [vmem:[%s2 + $0x28] sm:$0xff]
    %v36 = vld [vmem:[%s2 + $0x30] sm:$0xff]
    %v37 = vld [vmem:[%s2 + $0x38] sm:$0xff]
    %v38 = vld [vmem:[%s2 + $0x40] sm:$0xff]
    %v39 = vld [vmem:[%s2 + $0x48] sm:$0xff]
    %v40 = vld [vmem:[%s2 + $0x50] sm:$0xff]
    %v41 = vld [vmem:[%s2 + $0x58] sm:$0xff]
    %v42 = vld [vmem:[%s2 + $0x60] sm:$0x3]
    %44 = vset.pattern.permute.xlu0 0
    %45 = vperm.xlu0 %44, %v30
    %v46 = vpop.permute.xlu0 %45
    %49 = vset.pattern.permute.xlu0 0
    %50 = vperm.xlu0 %49, %v31
    %v51 = vpop.permute.xlu0 %50
    %54 = vset.pattern.permute.xlu0 0
    %55 = vperm.xlu0 %54, %v32
    %v56 = vpop.permute.xlu0 %55
    %59 = vset.pattern.permute.xlu0 0
    %60 = vperm.xlu0 %59, %v33
    %v61 = vpop.permute.xlu0 %60
    %64 = vset.pattern.permute.xlu0 0
    %65 = vperm.xlu0 %64, %v34
    %v66 = vpop.permute.xlu0 %65
    %69 = vset.pattern.permute.xlu0 0
    %70 = vperm.xlu0 %69, %v35
    %v71 = vpop.permute.xlu0 %70
    %74 = vset.pattern.permute.xlu0 0
    %75 = vperm.xlu0 %74, %v36
    %v76 = vpop.permute.xlu0 %75
    %79 = vset.pattern.permute.xlu0 0
    %80 = vperm.xlu0 %79, %v37
    %v81 = vpop.permute.xlu0 %80
    %v91 = vunpack.c.l.b16 %v17
    %v92 = vunpack.c.l.b16 %v18
    %v93 = vunpack.c.l.b16 %v19
    %v94 = vunpack.c.l.b16 %v20
    %v95 = vunpack.c.l.b16 %v21
    %v96 = vunpack.c.l.b16 %v22
    %v97 = vunpack.c.l.b16 %v23
    %v98 = vunpack.c.l.b16 %v24
    %v99 = vpack.c.b16 %v92, %v91
    %v100 = vpack.c.b16 %v94, %v93
    %v101 = vpack.c.b16 %v96, %v95
    %v102 = vpack.c.b16 %v98, %v97
    %vm103 = vcmask 31744
    %v105 = vsel %vm103, %v99, 0
    %v108 = vsel %vm103, %v100, 0
    %v111 = vsel %vm103, %v101, 0
    %v114 = vsel %vm103, %v102, 0
    %vm116 = vcmask 1041408
    %v118 = vsel %vm116, %v16, 0
    %120 = vmatprep.subr.bf16.mxu0 0
    %121 = vmatpush1.bf16.msra.mxu0 0
    %122 = vmatprep.subr.bf16.mxu0 0
    %123 = vmatpush1.bf16.msra.mxu0 0
    %124 = vmatprep.subr.bf16.mxu0 0
    %125 = vmatpush1.bf16.msra.mxu0 0
    %126 = vmatprep.subr.bf16.mxu0 0
    %127 = vmatpush1.bf16.msra.mxu0 0
    %128 = vmatprep.subr.bf16.mxu0 0
    %129 = vmatpush1.bf16.msra.mxu0 0
    %130 = vmatprep.subr.bf16.mxu0 0
    %131 = vmatpush1.bf16.msra.mxu0 0
    %132 = vmatprep.subr.bf16.mxu0 0
    %133 = vmatpush1.bf16.msra.mxu0 0
    %134 = vmatprep.subr.bf16.mxu0 0
    %135 = vmatpush1.bf16.msra.mxu0 %v118
    %136 = vmatprep.subr.bf16.mxu0 0
    %137 = vmatpush2.bf16.msra.mxu0 0
    %138 = vmatprep.subr.bf16.mxu0 0
    %139 = vmatpush2.bf16.msra.mxu0 0
    %140 = vmatprep.subr.bf16.mxu0 0
    %141 = vmatpush2.bf16.msra.mxu0 0
    %142 = vmatprep.subr.bf16.mxu0 0
    %143 = vmatpush2.bf16.msra.mxu0 0
    %144 = vmatprep.subr.bf16.mxu0 0
    %145 = vmatpush2.bf16.msra.mxu0 0
    %146 = vmatprep.subr.bf16.mxu0 0
    %147 = vmatpush2.bf16.msra.mxu0 0
    %148 = vmatprep.subr.bf16.mxu0 0
    %149 = vmatpush2.bf16.msra.mxu0 0
    %150 = vmatprep.subr.bf16.mxu0 0
    %151 = vmatpush2.bf16.msra.mxu0 0
    %152 = vmatprep.mubr.bf16.mxu0 0
    %153 = vmatmul.mubr.bf16.gmra.mxu0 %v105
    %v154 = vpop.f32.mrf.mxu0
    %v155 = vadd.f32 %v46, %v154
    %v156 = vpop.f32.mrf.mxu0
    %v157 = vpop.f32.mrf.mxu0
    %v158 = vadd.f32 %v51, %v157
    %v159 = vpop.f32.mrf.mxu0
    %160 = vmatprep.mubr.bf16.mxu0 0
    %161 = vmatmul.mubr.bf16.gmra.mxu0 %v108
    %v162 = vpop.f32.mrf.mxu0
    %v163 = vadd.f32 %v56, %v162
    %v164 = vpop.f32.mrf.mxu0
    %v165 = vpop.f32.mrf.mxu0
    %v166 = vadd.f32 %v61, %v165
    %v167 = vpop.f32.mrf.mxu0
    %168 = vmatprep.mubr.bf16.mxu0 0
    %169 = vmatmul.mubr.bf16.gmra.mxu0 %v111
    %v170 = vpop.f32.mrf.mxu0
    %v171 = vadd.f32 %v66, %v170
    %v172 = vpop.f32.mrf.mxu0
    %v173 = vpop.f32.mrf.mxu0
    %v174 = vadd.f32 %v71, %v173
    %v175 = vpop.f32.mrf.mxu0
    %176 = vmatprep.mubr.bf16.mxu0 0
    %177 = vmatmul.mubr.bf16.gmra.mxu0 %v114
    %v178 = vpop.f32.mrf.mxu0
    %v179 = vadd.f32 %v76, %v178
    %v180 = vpop.f32.mrf.mxu0
    %v181 = vpop.f32.mrf.mxu0
    %v182 = vadd.f32 %v81, %v181
    %v183 = vpop.f32.mrf.mxu0
    %184 = vdwg.mxu0
    %v185 = vmax.f32 %v155, 0.0
    %v186 = vmax.f32 %v158, 0.0
    %v187 = vmax.f32 %v163, 0.0
    %v188 = vmax.f32 %v166, 0.0
    %v189 = vmax.f32 %v171, 0.0
    %v190 = vmax.f32 %v174, 0.0
    %v191 = vmax.f32 %v179, 0.0
    %v192 = vmax.f32 %v182, 0.0
    %v193 = vpack.c.bf16 %v186, %v185
    %v194 = vpack.c.bf16 %v188, %v187
    %v195 = vpack.c.bf16 %v190, %v189
    %v196 = vpack.c.bf16 %v192, %v191
    %198 = vset.pattern.permute.xlu0 0
    %199 = vperm.xlu0 %198, %v38
    %v200 = vpop.permute.xlu0 %199
    %203 = vset.pattern.permute.xlu0 0
    %204 = vperm.xlu0 %203, %v39
    %v205 = vpop.permute.xlu0 %204
    %208 = vset.pattern.permute.xlu0 0
    %209 = vperm.xlu0 %208, %v40
    %v210 = vpop.permute.xlu0 %209
    %213 = vset.pattern.permute.xlu0 0
    %214 = vperm.xlu0 %213, %v41
    %v215 = vpop.permute.xlu0 %214
    %v221 = vunpack.c.l.b16 %v25
    %v222 = vunpack.c.l.b16 %v26
    %v223 = vunpack.c.l.b16 %v27
    %v224 = vunpack.c.l.b16 %v28
    %v225 = vpack.c.b16 %v222, %v221
    %v226 = vpack.c.b16 %v224, %v223
    %vm227 = vcmask 523264
    %v229 = vsel %vm227, %v225, 0
    %v232 = vsel %vm227, %v226, 0
    %234 = vmatprep.subr.bf16.mxu0 0
    %235 = vmatpush1.bf16.msra.mxu0 0
    %236 = vmatprep.subr.bf16.mxu0 0
    %237 = vmatpush1.bf16.msra.mxu0 0
    %238 = vmatprep.subr.bf16.mxu0 0
    %239 = vmatpush1.bf16.msra.mxu0 0
    %240 = vmatprep.subr.bf16.mxu0 0
    %241 = vmatpush1.bf16.msra.mxu0 0
    %242 = vmatprep.subr.bf16.mxu0 0
    %243 = vmatpush1.bf16.msra.mxu0 %v196
    %244 = vmatprep.subr.bf16.mxu0 0
    %245 = vmatpush1.bf16.msra.mxu0 %v195
    %246 = vmatprep.subr.bf16.mxu0 0
    %247 = vmatpush1.bf16.msra.mxu0 %v194
    %248 = vmatprep.subr.bf16.mxu0 0
    %249 = vmatpush1.bf16.msra.mxu0 %v193
    %250 = vmatprep.subr.bf16.mxu0 0
    %251 = vmatpush2.bf16.msra.mxu0 0
    %252 = vmatprep.subr.bf16.mxu0 0
    %253 = vmatpush2.bf16.msra.mxu0 0
    %254 = vmatprep.subr.bf16.mxu0 0
    %255 = vmatpush2.bf16.msra.mxu0 0
    %256 = vmatprep.subr.bf16.mxu0 0
    %257 = vmatpush2.bf16.msra.mxu0 0
    %258 = vmatprep.subr.bf16.mxu0 0
    %259 = vmatpush2.bf16.msra.mxu0 0
    %260 = vmatprep.subr.bf16.mxu0 0
    %261 = vmatpush2.bf16.msra.mxu0 0
    %262 = vmatprep.subr.bf16.mxu0 0
    %263 = vmatpush2.bf16.msra.mxu0 0
    %264 = vmatprep.subr.bf16.mxu0 0
    %265 = vmatpush2.bf16.msra.mxu0 0
    %266 = vmatprep.mubr.bf16.mxu0 0
    %267 = vmatmul.mubr.bf16.gmra.mxu0 %v229
    %v268 = vpop.f32.mrf.mxu0
    %v269 = vadd.f32 %v200, %v268
    %v270 = vpop.f32.mrf.mxu0
    %v271 = vpop.f32.mrf.mxu0
    %v272 = vadd.f32 %v205, %v271
    %v273 = vpop.f32.mrf.mxu0
    %274 = vmatprep.mubr.bf16.mxu0 0
    %275 = vmatmul.mubr.bf16.gmra.mxu0 %v232
    %v276 = vpop.f32.mrf.mxu0
    %v277 = vadd.f32 %v210, %v276
    %v278 = vpop.f32.mrf.mxu0
    %v279 = vpop.f32.mrf.mxu0
    %v280 = vadd.f32 %v215, %v279
    %v281 = vpop.f32.mrf.mxu0
    %282 = vdwg.mxu0
    %v283 = vmax.f32 %v269, 0.0
    %v284 = vmax.f32 %v272, 0.0
    %v285 = vmax.f32 %v277, 0.0
    %v286 = vmax.f32 %v280, 0.0
    %v287 = vpack.c.bf16 %v284, %v283
    %v288 = vpack.c.bf16 %v286, %v285
    %290 = vset.pattern.permute.xlu0 0
    %291 = vperm.xlu0 %290, %v42
    %v292 = vpop.permute.xlu0 %291
    %vm294 = vcmask 261120
    %v296 = vsel %vm294, %v29, 0
    %298 = vmatprep.subr.bf16.mxu0 0
    %299 = vmatpush1.bf16.msra.mxu0 0
    %300 = vmatprep.subr.bf16.mxu0 0
    %301 = vmatpush1.bf16.msra.mxu0 0
    %302 = vmatprep.subr.bf16.mxu0 0
    %303 = vmatpush1.bf16.msra.mxu0 0
    %304 = vmatprep.subr.bf16.mxu0 0
    %305 = vmatpush1.bf16.msra.mxu0 0
    %306 = vmatprep.subr.bf16.mxu0 0
    %307 = vmatpush1.bf16.msra.mxu0 0
    %308 = vmatprep.subr.bf16.mxu0 0
    %309 = vmatpush1.bf16.msra.mxu0 0
    %310 = vmatprep.subr.bf16.mxu0 0
    %311 = vmatpush1.bf16.msra.mxu0 %v288
    %312 = vmatprep.subr.bf16.mxu0 0
    %313 = vmatpush1.bf16.msra.mxu0 %v287
    %314 = vmatprep.subr.bf16.mxu0 0
    %315 = vmatpush2.bf16.msra.mxu0 0
    %316 = vmatprep.subr.bf16.mxu0 0
    %317 = vmatpush2.bf16.msra.mxu0 0
    %318 = vmatprep.subr.bf16.mxu0 0
    %319 = vmatpush2.bf16.msra.mxu0 0
    %320 = vmatprep.subr.bf16.mxu0 0
    %321 = vmatpush2.bf16.msra.mxu0 0
    %322 = vmatprep.subr.bf16.mxu0 0
    %323 = vmatpush2.bf16.msra.mxu0 0
    %324 = vmatprep.subr.bf16.mxu0 0
    %325 = vmatpush2.bf16.msra.mxu0 0
    %326 = vmatprep.subr.bf16.mxu0 0
    %327 = vmatpush2.bf16.msra.mxu0 0
    %328 = vmatprep.subr.bf16.mxu0 0
    %329 = vmatpush2.bf16.msra.mxu0 0
    %330 = vmatprep.mubr.bf16.mxu0 0
    %331 = vmatmul.mubr.bf16.gmra.mxu0 %v296
    %v332 = vpop.f32.mrf.mxu0
    %v333 = vadd.f32 %v292, %v332
    %v334 = vpop.f32.mrf.mxu0
    %v335 = vpop.f32.mrf.mxu0
    %v336 = vpop.f32.mrf.mxu0
    %337 = vdwg.mxu0
    %338 = vst [vmem:[#allocation2] sm:$0x3] %v333
    // Predicated region
    $region14: #{tpu_custom_call.1} parent=1 // pred_check
      _
    $region15: #{tpu_custom_call.1} parent=1 // pred_check_branch
      %340 = sbr.rel (0) target = $region17
    $region16: #{tpu_custom_call.1} parent=1 // pred_region
      %s342 = ssub.s32 32, 32
      %343 = vsyncadd [#allocation3], %s342
      %s345 = sshll.u32 [#allocation2], 4
      %s346 = int_to_ptr.vmem [resolvable:$true] %s345
      %348 = dma.vmem_to_hbm [thread:$0]  %s346, 32, %s3, [#allocation3]
    $region17: #{tpu_custom_call.1} parent=1 // pred_fallthru
      _
    // Predicated region
    $region18: #{tpu_custom_call.1} parent=1 // pred_check
      _
    $region19: #{tpu_custom_call.1} parent=1 // pred_check_branch
      %350 = sbr.rel (0) target = $region21
    $region20: #{tpu_custom_call.1} parent=1 // pred_region
      %351 = dma.done [#allocation3], 32
    $region21: #{tpu_custom_call.1} parent=1 // pred_fallthru
      _
    %352 = vsyncpa [#allocation3], 1

</llo_original>
